<compile_context>
chip_gen: v7x
topology: tpu7x:2x2x1
jax: 0.10.0
libtpu: 0.0.40
codegen_flags: <defaults>
</compile_context>

<pallas_src>
import functools
import numpy as np
import jax
import jax.numpy as jnp
from jax.experimental import pallas as pl
from jax.experimental.pallas import tpu as pltpu


def _charb_ffl_kernel(x_ref, y_ref, w1_ref, wbr_ref, wbi_ref, out_ref,
                      *, eps, c, h, w, inv_n):
    # x_ref / y_ref: (H, C*W) with column index j = chan*W + w (lane-dense).
    d = x_ref[...] - y_ref[...]

    # ---- Charbonnier term: sum of sqrt(d^2 + eps); mean folded into inv_n ----
    cb = jnp.sum(jnp.sqrt(d * d + eps))

    # ---- FFL term: orthonormal 2-D DFT of the difference (fft2 is linear) ----
    # Stage 1 (along H): one matmul with stacked weights [Wr_H ; Wi_H] (2H, H).
    #   e[:H] = Re(F1), e[H:] = Im(F1)
    e = jnp.dot(w1_ref[...], d, preferred_element_type=jnp.float32)      # (2H, C*W)

    # Stage 2 (along W, per channel) with block-diagonal kron(I_C, W_W):
    # two matmuls on the stacked operand replace four per-part matmuls.
    f1 = jnp.dot(e, wbr_ref[...], preferred_element_type=jnp.float32)    # [Re@Wr ; Im@Wr]
    f2 = jnp.dot(e, wbi_ref[...], preferred_element_type=jnp.float32)    # [Re@Wi ; Im@Wi]

    fr = f1[:h, :] - f2[h:, :]        # Re(F) = Re@Wr - Im@Wi  (sublane-aligned slices)
    fi = f2[:h, :] + f1[h:, :]        # Im(F) = Re@Wi + Im@Wr

    freq = fr * fr + fi * fi          # |dF|^2              (H, C*W)
    mag = jnp.sqrt(freq)              # |dF|^alpha, alpha=1

    # Per-(image,patch,channel) spectrum-weight normalization, factored:
    #   sum(w * freq) = sum(mag * freq) / max(mag)   (0 if max == 0)
    # (the clamp(0,1) in the reference is a no-op since mag/max(mag) <= 1).
    p = mag * freq
    m_row = jnp.max(mag, axis=0, keepdims=True)   # (1, C*W)
    s_row = jnp.sum(p, axis=0, keepdims=True)     # (1, C*W)

    ffl = jnp.float32(0.0)
    for ci in range(c):               # static loop over contiguous lane segments
        lo = ci * w
        mx_c = jnp.max(m_row[:, lo:lo + w])
        s_c = jnp.sum(s_row[:, lo:lo + w])
        denom = jnp.where(mx_c > 0.0, mx_c, 1.0)
        ffl = ffl + jnp.where(mx_c > 0.0, s_c / denom, 0.0)

    # Batch N = 1 -> both means divide by C*H*W; fold into one scale.
    out_ref[...] = ((cb + ffl) * inv_n) * jnp.ones((1, 1), jnp.float32)


def _dft_matrices(n):
    # torch.fft.fft2(..., norm='ortho'): exp(-2*pi*i*k*m/N) / sqrt(N)
    k = np.arange(n)
    ang = 2.0 * np.pi * np.outer(k, k) / n
    scale = 1.0 / np.sqrt(n)
    wr = (np.cos(ang) * scale).astype(np.float32)
    wi = (-np.sin(ang) * scale).astype(np.float32)
    return wr, wi


@functools.partial(jax.jit, static_argnames=("eps",))
def charbonnier_ffl_loss(x, y, eps=1e-6):
    c, h, w = x.shape
    cw = c * w

    wrh_np, wih_np = _dft_matrices(h)
    wrw_np, wiw_np = _dft_matrices(w)
    w1_np = np.concatenate([wrh_np, wih_np], axis=0)   # (2H, H) stacked Re/Im
    eye_c = np.eye(c, dtype=np.float32)
    wbr_np = np.kron(eye_c, wrw_np)                    # (C*W, C*W) block-diag Re
    wbi_np = np.kron(eye_c, wiw_np)                    # (C*W, C*W) block-diag Im

    w1 = jnp.asarray(w1_np)
    wbr = jnp.asarray(wbr_np)
    wbi = jnp.asarray(wbi_np)

    # Lane-dense channel packing: (C, H, W) -> (H, C*W), column j = c*W + w.
    xt = jnp.transpose(x, (1, 0, 2)).reshape(h, cw)
    yt = jnp.transpose(y, (1, 0, 2)).reshape(h, cw)

    kernel = functools.partial(_charb_ffl_kernel, eps=eps, c=c, h=h, w=w,
                               inv_n=1.0 / float(c * h * w))

    # VMEM: double-buffered inputs/weights + a handful of (2H, C*W) f32 temps.
    vmem_bytes = 4 * (2 * (2 * h * cw + 2 * h * h + 2 * cw * cw)
                      + 16 * 2 * h * cw)
    vmem_limit = int(min(max(vmem_bytes + (1 << 20), 4 << 20), 64 << 20))

    out = pl.pallas_call(
        kernel,
        out_shape=jax.ShapeDtypeStruct((1, 1), jnp.float32),
        grid_spec=pltpu.PrefetchScalarGridSpec(
            num_scalar_prefetch=0,
            grid=(1,),
            in_specs=[
                pl.BlockSpec((h, cw), lambda i: (0, 0)),
                pl.BlockSpec((h, cw), lambda i: (0, 0)),
                pl.BlockSpec((2 * h, h), lambda i: (0, 0)),
                pl.BlockSpec((cw, cw), lambda i: (0, 0)),
                pl.BlockSpec((cw, cw), lambda i: (0, 0)),
            ],
            out_specs=pl.BlockSpec((1, 1), lambda i: (0, 0)),
        ),
        compiler_params=pltpu.CompilerParams(
            dimension_semantics=("arbitrary",),
            vmem_limit_bytes=vmem_limit),
    )(xt, yt, w1, wbr, wbi)

    return out[0, 0]


def reference_loss(x, y, eps=1e-6):
    # Pure-JAX reference mirroring the PyTorch forward (FFL with defaults).
    diff = x - y
    cb = jnp.mean(jnp.sqrt(diff * diff + eps))
    xf = jnp.fft.fft2(x[None, None].astype(jnp.float32), norm="ortho")
    yf = jnp.fft.fft2(y[None, None].astype(jnp.float32), norm="ortho")
    d = xf - yf
    freq_dist = d.real ** 2 + d.imag ** 2
    mag = jnp.sqrt(freq_dist)
    mx = jnp.max(mag, axis=(-2, -1), keepdims=True)
    wmat = jnp.where(mx > 0, mag / jnp.where(mx > 0, mx, 1.0), 0.0)
    wmat = jnp.clip(wmat, 0.0, 1.0)
    ffl = jnp.mean(wmat * freq_dist)
    return cb + ffl


if __name__ == "__main__":
    key = jax.random.PRNGKey(0)
    kx, ky = jax.random.split(key)
    C, H, W = 8, 16, 16            # C*W = 128 -> fully lane-dense blocks
    X = jax.random.normal(kx, (C, H, W), dtype=jnp.float32)
    Y = jax.random.normal(ky, (C, H, W), dtype=jnp.float32)

    loss = charbonnier_ffl_loss(X, Y)
    jax.block_until_ready(loss)

    ref = reference_loss(X, Y)
    np.testing.assert_allclose(np.asarray(loss), np.asarray(ref),
                               rtol=5e-3, atol=1e-4)
    print("KERNEL_OK")
</pallas_src>

<mosaic_0001>
module attributes {stable_mosaic.version = 11 : i64} {
  func.func @_charb_ffl_kernel(%arg0: i32, %arg1: memref<16x128xf32, #tpu.memory_space<vmem>>, %arg2: memref<16x128xf32, #tpu.memory_space<vmem>>, %arg3: memref<32x16xf32, #tpu.memory_space<vmem>>, %arg4: memref<128x128xf32, #tpu.memory_space<vmem>>, %arg5: memref<128x128xf32, #tpu.memory_space<vmem>>, %arg6: memref<1x1xf32, #tpu.memory_space<vmem>>) attributes {dimension_semantics = [#tpu.dimension_semantics<arbitrary>], iteration_bounds = array<i64: 1>, scalar_prefetch = 0 : i64, scratch_operands = 0 : i64, tpu.core_type = #tpu.core_type<tc>, window_params = [{pipeline_mode = #tpu.pipeline_mode<synchronous>, transform_indices = @transform_0, window_bounds = array<i64: 16, 128>}, {pipeline_mode = #tpu.pipeline_mode<synchronous>, transform_indices = @transform_1, window_bounds = array<i64: 16, 128>}, {pipeline_mode = #tpu.pipeline_mode<synchronous>, transform_indices = @transform_2, window_bounds = array<i64: 32, 16>}, {pipeline_mode = #tpu.pipeline_mode<synchronous>, transform_indices = @transform_3, window_bounds = array<i64: 128, 128>}, {pipeline_mode = #tpu.pipeline_mode<synchronous>, transform_indices = @transform_4, window_bounds = array<i64: 128, 128>}, {pipeline_mode = #tpu.pipeline_mode<synchronous>, transform_indices = @transform_5, window_bounds = array<i64: 1, 1>}]} {
    %c0 = arith.constant 0 : index
    %c0_0 = arith.constant 0 : index
    %0 = vector.load %arg1[%c0, %c0_0] : memref<16x128xf32, #tpu.memory_space<vmem>>, vector<16x128xf32>
    %c0_1 = arith.constant 0 : index
    %c0_2 = arith.constant 0 : index
    %1 = vector.load %arg2[%c0_1, %c0_2] : memref<16x128xf32, #tpu.memory_space<vmem>>, vector<16x128xf32>
    %2 = arith.subf %0, %1 : vector<16x128xf32>
    %3 = arith.mulf %2, %2 : vector<16x128xf32>
    %cst = arith.constant 9.99999997E-7 : f32
    %4 = vector.broadcast %cst : f32 to vector<16x128xf32>
    %5 = arith.addf %3, %4 : vector<16x128xf32>
    %6 = math.sqrt %5 : vector<16x128xf32>
    %7 = vector.shape_cast %6 : vector<16x128xf32> to vector<1x16x128xf32>
    %cst_3 = arith.constant dense<0.000000e+00> : vector<1xf32>
    %8 = vector.multi_reduction <add>, %7, %cst_3 [1, 2] : vector<1x16x128xf32> to vector<1xf32>
    %9 = vector.shape_cast %8 : vector<1xf32> to vector<1x1x1xf32>
    %10 = vector.extract %9[0, 0, 0] : f32 from vector<1x1x1xf32>
    %c0_4 = arith.constant 0 : index
    %c0_5 = arith.constant 0 : index
    %11 = vector.load %arg3[%c0_4, %c0_5] : memref<32x16xf32, #tpu.memory_space<vmem>>, vector<32x16xf32>
    %cst_6 = arith.constant dense<0.000000e+00> : vector<32x128xf32>
    %12 = tpu.matmul %11, %2, %cst_6 {dimension_numbers = #tpu.dot_dimension_numbers<[1], [0], [0], [1], [0, 0, 1, 1], [], []>} : vector<32x16xf32>, vector<16x128xf32>, vector<32x128xf32> -> vector<32x128xf32>
    %c0_7 = arith.constant 0 : index
    %c0_8 = arith.constant 0 : index
    %13 = vector.load %arg4[%c0_7, %c0_8] : memref<128x128xf32, #tpu.memory_space<vmem>>, vector<128x128xf32>
    %cst_9 = arith.constant dense<0.000000e+00> : vector<32x128xf32>
    %14 = tpu.matmul %12, %13, %cst_9 {dimension_numbers = #tpu.dot_dimension_numbers<[1], [0], [0], [1], [0, 0, 1, 1], [], []>} : vector<32x128xf32>, vector<128x128xf32>, vector<32x128xf32> -> vector<32x128xf32>
    %c0_10 = arith.constant 0 : index
    %c0_11 = arith.constant 0 : index
    %15 = vector.load %arg5[%c0_10, %c0_11] : memref<128x128xf32, #tpu.memory_space<vmem>>, vector<128x128xf32>
    %cst_12 = arith.constant dense<0.000000e+00> : vector<32x128xf32>
    %16 = tpu.matmul %12, %15, %cst_12 {dimension_numbers = #tpu.dot_dimension_numbers<[1], [0], [0], [1], [0, 0, 1, 1], [], []>} : vector<32x128xf32>, vector<128x128xf32>, vector<32x128xf32> -> vector<32x128xf32>
    %17 = vector.extract_strided_slice %14 {offsets = [0, 0], sizes = [16, 128], strides = [1, 1]} : vector<32x128xf32> to vector<16x128xf32>
    %18 = vector.extract_strided_slice %16 {offsets = [16, 0], sizes = [16, 128], strides = [1, 1]} : vector<32x128xf32> to vector<16x128xf32>
    %19 = arith.subf %17, %18 : vector<16x128xf32>
    %20 = vector.extract_strided_slice %16 {offsets = [0, 0], sizes = [16, 128], strides = [1, 1]} : vector<32x128xf32> to vector<16x128xf32>
    %21 = vector.extract_strided_slice %14 {offsets = [16, 0], sizes = [16, 128], strides = [1, 1]} : vector<32x128xf32> to vector<16x128xf32>
    %22 = arith.addf %20, %21 : vector<16x128xf32>
    %23 = arith.mulf %19, %19 : vector<16x128xf32>
    %24 = arith.mulf %22, %22 : vector<16x128xf32>
    %25 = arith.addf %23, %24 : vector<16x128xf32>
    %26 = math.sqrt %25 : vector<16x128xf32>
    %27 = arith.mulf %26, %25 : vector<16x128xf32>
    %cst_13 = arith.constant dense<0xFF800000> : vector<128xf32>
    %28 = vector.multi_reduction <maximumf>, %26, %cst_13 [0] : vector<16x128xf32> to vector<128xf32>
    %29 = vector.shape_cast %28 : vector<128xf32> to vector<1x128xf32>
    %cst_14 = arith.constant dense<0.000000e+00> : vector<128xf32>
    %30 = vector.multi_reduction <add>, %27, %cst_14 [0] : vector<16x128xf32> to vector<128xf32>
    %31 = vector.shape_cast %30 : vector<128xf32> to vector<1x128xf32>
    %32 = vector.extract_strided_slice %29 {offsets = [0, 0], sizes = [1, 16], strides = [1, 1]} : vector<1x128xf32> to vector<1x16xf32>
    %33 = vector.shape_cast %32 : vector<1x16xf32> to vector<1x1x16xf32>
    %cst_15 = arith.constant dense<0xFF800000> : vector<1xf32>
    %34 = vector.multi_reduction <maximumf>, %33, %cst_15 [1, 2] : vector<1x1x16xf32> to vector<1xf32>
    %35 = vector.shape_cast %34 : vector<1xf32> to vector<1x1x1xf32>
    %36 = vector.extract %35[0, 0, 0] : f32 from vector<1x1x1xf32>
    %37 = vector.extract_strided_slice %31 {offsets = [0, 0], sizes = [1, 16], strides = [1, 1]} : vector<1x128xf32> to vector<1x16xf32>
    %38 = vector.shape_cast %37 : vector<1x16xf32> to vector<1x1x16xf32>
    %cst_16 = arith.constant dense<0.000000e+00> : vector<1xf32>
    %39 = vector.multi_reduction <add>, %38, %cst_16 [1, 2] : vector<1x1x16xf32> to vector<1xf32>
    %40 = vector.shape_cast %39 : vector<1xf32> to vector<1x1x1xf32>
    %41 = vector.extract %40[0, 0, 0] : f32 from vector<1x1x1xf32>
    %cst_17 = arith.constant 0.000000e+00 : f32
    %42 = arith.cmpf ogt, %36, %cst_17 : f32
    %cst_18 = arith.constant 1.000000e+00 : f32
    %43 = arith.select %42, %36, %cst_18 : f32
    %cst_19 = arith.constant 0.000000e+00 : f32
    %44 = arith.cmpf ogt, %36, %cst_19 : f32
    %45 = arith.divf %41, %43 : f32
    %cst_20 = arith.constant 0.000000e+00 : f32
    %46 = arith.select %44, %45, %cst_20 : f32
    %cst_21 = arith.constant 0.000000e+00 : f32
    %47 = arith.addf %cst_21, %46 : f32
    %48 = vector.extract_strided_slice %29 {offsets = [0, 16], sizes = [1, 16], strides = [1, 1]} : vector<1x128xf32> to vector<1x16xf32>
    %49 = vector.shape_cast %48 : vector<1x16xf32> to vector<1x1x16xf32>
    %cst_22 = arith.constant dense<0xFF800000> : vector<1xf32>
    %50 = vector.multi_reduction <maximumf>, %49, %cst_22 [1, 2] : vector<1x1x16xf32> to vector<1xf32>
    %51 = vector.shape_cast %50 : vector<1xf32> to vector<1x1x1xf32>
    %52 = vector.extract %51[0, 0, 0] : f32 from vector<1x1x1xf32>
    %53 = vector.extract_strided_slice %31 {offsets = [0, 16], sizes = [1, 16], strides = [1, 1]} : vector<1x128xf32> to vector<1x16xf32>
    %54 = vector.shape_cast %53 : vector<1x16xf32> to vector<1x1x16xf32>
    %cst_23 = arith.constant dense<0.000000e+00> : vector<1xf32>
    %55 = vector.multi_reduction <add>, %54, %cst_23 [1, 2] : vector<1x1x16xf32> to vector<1xf32>
    %56 = vector.shape_cast %55 : vector<1xf32> to vector<1x1x1xf32>
    %57 = vector.extract %56[0, 0, 0] : f32 from vector<1x1x1xf32>
    %cst_24 = arith.constant 0.000000e+00 : f32
    %58 = arith.cmpf ogt, %52, %cst_24 : f32
    %cst_25 = arith.constant 1.000000e+00 : f32
    %59 = arith.select %58, %52, %cst_25 : f32
    %cst_26 = arith.constant 0.000000e+00 : f32
    %60 = arith.cmpf ogt, %52, %cst_26 : f32
    %61 = arith.divf %57, %59 : f32
    %cst_27 = arith.constant 0.000000e+00 : f32
    %62 = arith.select %60, %61, %cst_27 : f32
    %63 = arith.addf %47, %62 : f32
    %64 = vector.extract_strided_slice %29 {offsets = [0, 32], sizes = [1, 16], strides = [1, 1]} : vector<1x128xf32> to vector<1x16xf32>
    %65 = vector.shape_cast %64 : vector<1x16xf32> to vector<1x1x16xf32>
    %cst_28 = arith.constant dense<0xFF800000> : vector<1xf32>
    %66 = vector.multi_reduction <maximumf>, %65, %cst_28 [1, 2] : vector<1x1x16xf32> to vector<1xf32>
    %67 = vector.shape_cast %66 : vector<1xf32> to vector<1x1x1xf32>
    %68 = vector.extract %67[0, 0, 0] : f32 from vector<1x1x1xf32>
    %69 = vector.extract_strided_slice %31 {offsets = [0, 32], sizes = [1, 16], strides = [1, 1]} : vector<1x128xf32> to vector<1x16xf32>
    %70 = vector.shape_cast %69 : vector<1x16xf32> to vector<1x1x16xf32>
    %cst_29 = arith.constant dense<0.000000e+00> : vector<1xf32>
    %71 = vector.multi_reduction <add>, %70, %cst_29 [1, 2] : vector<1x1x16xf32> to vector<1xf32>
    %72 = vector.shape_cast %71 : vector<1xf32> to vector<1x1x1xf32>
    %73 = vector.extract %72[0, 0, 0] : f32 from vector<1x1x1xf32>
    %cst_30 = arith.constant 0.000000e+00 : f32
    %74 = arith.cmpf ogt, %68, %cst_30 : f32
    %cst_31 = arith.constant 1.000000e+00 : f32
    %75 = arith.select %74, %68, %cst_31 : f32
    %cst_32 = arith.constant 0.000000e+00 : f32
    %76 = arith.cmpf ogt, %68, %cst_32 : f32
    %77 = arith.divf %73, %75 : f32
    %cst_33 = arith.constant 0.000000e+00 : f32
    %78 = arith.select %76, %77, %cst_33 : f32
    %79 = arith.addf %63, %78 : f32
    %80 = vector.extract_strided_slice %29 {offsets = [0, 48], sizes = [1, 16], strides = [1, 1]} : vector<1x128xf32> to vector<1x16xf32>
    %81 = vector.shape_cast %80 : vector<1x16xf32> to vector<1x1x16xf32>
    %cst_34 = arith.constant dense<0xFF800000> : vector<1xf32>
    %82 = vector.multi_reduction <maximumf>, %81, %cst_34 [1, 2] : vector<1x1x16xf32> to vector<1xf32>
    %83 = vector.shape_cast %82 : vector<1xf32> to vector<1x1x1xf32>
    %84 = vector.extract %83[0, 0, 0] : f32 from vector<1x1x1xf32>
    %85 = vector.extract_strided_slice %31 {offsets = [0, 48], sizes = [1, 16], strides = [1, 1]} : vector<1x128xf32> to vector<1x16xf32>
    %86 = vector.shape_cast %85 : vector<1x16xf32> to vector<1x1x16xf32>
    %cst_35 = arith.constant dense<0.000000e+00> : vector<1xf32>
    %87 = vector.multi_reduction <add>, %86, %cst_35 [1, 2] : vector<1x1x16xf32> to vector<1xf32>
    %88 = vector.shape_cast %87 : vector<1xf32> to vector<1x1x1xf32>
    %89 = vector.extract %88[0, 0, 0] : f32 from vector<1x1x1xf32>
    %cst_36 = arith.constant 0.000000e+00 : f32
    %90 = arith.cmpf ogt, %84, %cst_36 : f32
    %cst_37 = arith.constant 1.000000e+00 : f32
    %91 = arith.select %90, %84, %cst_37 : f32
    %cst_38 = arith.constant 0.000000e+00 : f32
    %92 = arith.cmpf ogt, %84, %cst_38 : f32
    %93 = arith.divf %89, %91 : f32
    %cst_39 = arith.constant 0.000000e+00 : f32
    %94 = arith.select %92, %93, %cst_39 : f32
    %95 = arith.addf %79, %94 : f32
    %96 = vector.extract_strided_slice %29 {offsets = [0, 64], sizes = [1, 16], strides = [1, 1]} : vector<1x128xf32> to vector<1x16xf32>
    %97 = vector.shape_cast %96 : vector<1x16xf32> to vector<1x1x16xf32>
    %cst_40 = arith.constant dense<0xFF800000> : vector<1xf32>
    %98 = vector.multi_reduction <maximumf>, %97, %cst_40 [1, 2] : vector<1x1x16xf32> to vector<1xf32>
    %99 = vector.shape_cast %98 : vector<1xf32> to vector<1x1x1xf32>
    %100 = vector.extract %99[0, 0, 0] : f32 from vector<1x1x1xf32>
    %101 = vector.extract_strided_slice %31 {offsets = [0, 64], sizes = [1, 16], strides = [1, 1]} : vector<1x128xf32> to vector<1x16xf32>
    %102 = vector.shape_cast %101 : vector<1x16xf32> to vector<1x1x16xf32>
    %cst_41 = arith.constant dense<0.000000e+00> : vector<1xf32>
    %103 = vector.multi_reduction <add>, %102, %cst_41 [1, 2] : vector<1x1x16xf32> to vector<1xf32>
    %104 = vector.shape_cast %103 : vector<1xf32> to vector<1x1x1xf32>
    %105 = vector.extract %104[0, 0, 0] : f32 from vector<1x1x1xf32>
    %cst_42 = arith.constant 0.000000e+00 : f32
    %106 = arith.cmpf ogt, %100, %cst_42 : f32
    %cst_43 = arith.constant 1.000000e+00 : f32
    %107 = arith.select %106, %100, %cst_43 : f32
    %cst_44 = arith.constant 0.000000e+00 : f32
    %108 = arith.cmpf ogt, %100, %cst_44 : f32
    %109 = arith.divf %105, %107 : f32
    %cst_45 = arith.constant 0.000000e+00 : f32
    %110 = arith.select %108, %109, %cst_45 : f32
    %111 = arith.addf %95, %110 : f32
    %112 = vector.extract_strided_slice %29 {offsets = [0, 80], sizes = [1, 16], strides = [1, 1]} : vector<1x128xf32> to vector<1x16xf32>
    %113 = vector.shape_cast %112 : vector<1x16xf32> to vector<1x1x16xf32>
    %cst_46 = arith.constant dense<0xFF800000> : vector<1xf32>
    %114 = vector.multi_reduction <maximumf>, %113, %cst_46 [1, 2] : vector<1x1x16xf32> to vector<1xf32>
    %115 = vector.shape_cast %114 : vector<1xf32> to vector<1x1x1xf32>
    %116 = vector.extract %115[0, 0, 0] : f32 from vector<1x1x1xf32>
    %117 = vector.extract_strided_slice %31 {offsets = [0, 80], sizes = [1, 16], strides = [1, 1]} : vector<1x128xf32> to vector<1x16xf32>
    %118 = vector.shape_cast %117 : vector<1x16xf32> to vector<1x1x16xf32>
    %cst_47 = arith.constant dense<0.000000e+00> : vector<1xf32>
    %119 = vector.multi_reduction <add>, %118, %cst_47 [1, 2] : vector<1x1x16xf32> to vector<1xf32>
    %120 = vector.shape_cast %119 : vector<1xf32> to vector<1x1x1xf32>
    %121 = vector.extract %120[0, 0, 0] : f32 from vector<1x1x1xf32>
    %cst_48 = arith.constant 0.000000e+00 : f32
    %122 = arith.cmpf ogt, %116, %cst_48 : f32
    %cst_49 = arith.constant 1.000000e+00 : f32
    %123 = arith.select %122, %116, %cst_49 : f32
    %cst_50 = arith.constant 0.000000e+00 : f32
    %124 = arith.cmpf ogt, %116, %cst_50 : f32
    %125 = arith.divf %121, %123 : f32
    %cst_51 = arith.constant 0.000000e+00 : f32
    %126 = arith.select %124, %125, %cst_51 : f32
    %127 = arith.addf %111, %126 : f32
    %128 = vector.extract_strided_slice %29 {offsets = [0, 96], sizes = [1, 16], strides = [1, 1]} : vector<1x128xf32> to vector<1x16xf32>
    %129 = vector.shape_cast %128 : vector<1x16xf32> to vector<1x1x16xf32>
    %cst_52 = arith.constant dense<0xFF800000> : vector<1xf32>
    %130 = vector.multi_reduction <maximumf>, %129, %cst_52 [1, 2] : vector<1x1x16xf32> to vector<1xf32>
    %131 = vector.shape_cast %130 : vector<1xf32> to vector<1x1x1xf32>
    %132 = vector.extract %131[0, 0, 0] : f32 from vector<1x1x1xf32>
    %133 = vector.extract_strided_slice %31 {offsets = [0, 96], sizes = [1, 16], strides = [1, 1]} : vector<1x128xf32> to vector<1x16xf32>
    %134 = vector.shape_cast %133 : vector<1x16xf32> to vector<1x1x16xf32>
    %cst_53 = arith.constant dense<0.000000e+00> : vector<1xf32>
    %135 = vector.multi_reduction <add>, %134, %cst_53 [1, 2] : vector<1x1x16xf32> to vector<1xf32>
    %136 = vector.shape_cast %135 : vector<1xf32> to vector<1x1x1xf32>
    %137 = vector.extract %136[0, 0, 0] : f32 from vector<1x1x1xf32>
    %cst_54 = arith.constant 0.000000e+00 : f32
    %138 = arith.cmpf ogt, %132, %cst_54 : f32
    %cst_55 = arith.constant 1.000000e+00 : f32
    %139 = arith.select %138, %132, %cst_55 : f32
    %cst_56 = arith.constant 0.000000e+00 : f32
    %140 = arith.cmpf ogt, %132, %cst_56 : f32
    %141 = arith.divf %137, %139 : f32
    %cst_57 = arith.constant 0.000000e+00 : f32
    %142 = arith.select %140, %141, %cst_57 : f32
    %143 = arith.addf %127, %142 : f32
    %144 = vector.extract_strided_slice %29 {offsets = [0, 112], sizes = [1, 16], strides = [1, 1]} : vector<1x128xf32> to vector<1x16xf32>
    %145 = vector.shape_cast %144 : vector<1x16xf32> to vector<1x1x16xf32>
    %cst_58 = arith.constant dense<0xFF800000> : vector<1xf32>
    %146 = vector.multi_reduction <maximumf>, %145, %cst_58 [1, 2] : vector<1x1x16xf32> to vector<1xf32>
    %147 = vector.shape_cast %146 : vector<1xf32> to vector<1x1x1xf32>
    %148 = vector.extract %147[0, 0, 0] : f32 from vector<1x1x1xf32>
    %149 = vector.extract_strided_slice %31 {offsets = [0, 112], sizes = [1, 16], strides = [1, 1]} : vector<1x128xf32> to vector<1x16xf32>
    %150 = vector.shape_cast %149 : vector<1x16xf32> to vector<1x1x16xf32>
    %cst_59 = arith.constant dense<0.000000e+00> : vector<1xf32>
    %151 = vector.multi_reduction <add>, %150, %cst_59 [1, 2] : vector<1x1x16xf32> to vector<1xf32>
    %152 = vector.shape_cast %151 : vector<1xf32> to vector<1x1x1xf32>
    %153 = vector.extract %152[0, 0, 0] : f32 from vector<1x1x1xf32>
    %cst_60 = arith.constant 0.000000e+00 : f32
    %154 = arith.cmpf ogt, %148, %cst_60 : f32
    %cst_61 = arith.constant 1.000000e+00 : f32
    %155 = arith.select %154, %148, %cst_61 : f32
    %cst_62 = arith.constant 0.000000e+00 : f32
    %156 = arith.cmpf ogt, %148, %cst_62 : f32
    %157 = arith.divf %153, %155 : f32
    %cst_63 = arith.constant 0.000000e+00 : f32
    %158 = arith.select %156, %157, %cst_63 : f32
    %159 = arith.addf %143, %158 : f32
    %160 = arith.addf %10, %159 : f32
    %cst_64 = arith.constant 4.8828125E-4 : f32
    %161 = arith.mulf %160, %cst_64 : f32
    %cst_65 = arith.constant 1.000000e+00 : f32
    %162 = vector.broadcast %cst_65 : f32 to vector<1x1xf32>
    %163 = vector.broadcast %161 : f32 to vector<1x1xf32>
    %164 = arith.mulf %163, %162 : vector<1x1xf32>
    %c0_66 = arith.constant 0 : index
    %c0_67 = arith.constant 0 : index
    %165 = vector.load %arg6[%c0_66, %c0_67] : memref<1x1xf32, #tpu.memory_space<vmem>>, vector<1x1xf32>
    tpu.vector_store %arg6[%c0_66, %c0_67], %164 {strides = array<i32>} : memref<1x1xf32, #tpu.memory_space<vmem>>, vector<1x1xf32>,
    return
  }
  func.func @transform_0(%arg0: i32) -> (i32, i32) {
    %c0_i32 = arith.constant 0 : i32
    %c0_i32_0 = arith.constant 0 : i32
    %c0_i32_1 = arith.constant 0 : i32
    return %c0_i32, %c0_i32_0 : i32, i32
  }
  func.func @transform_1(%arg0: i32) -> (i32, i32) {
    %c0_i32 = arith.constant 0 : i32
    %c0_i32_0 = arith.constant 0 : i32
    %c0_i32_1 = arith.constant 0 : i32
    return %c0_i32, %c0_i32_0 : i32, i32
  }
  func.func @transform_2(%arg0: i32) -> (i32, i32) {
    %c0_i32 = arith.constant 0 : i32
    %c0_i32_0 = arith.constant 0 : i32
    %c0_i32_1 = arith.constant 0 : i32
    return %c0_i32, %c0_i32_0 : i32, i32
  }
  func.func @transform_3(%arg0: i32) -> (i32, i32) {
    %c0_i32 = arith.constant 0 : i32
    %c0_i32_0 = arith.constant 0 : i32
    %c0_i32_1 = arith.constant 0 : i32
    return %c0_i32, %c0_i32_0 : i32, i32
  }
  func.func @transform_4(%arg0: i32) -> (i32, i32) {
    %c0_i32 = arith.constant 0 : i32
    %c0_i32_0 = arith.constant 0 : i32
    %c0_i32_1 = arith.constant 0 : i32
    return %c0_i32, %c0_i32_0 : i32, i32
  }
  func.func @transform_5(%arg0: i32) -> (i32, i32) {
    %c0_i32 = arith.constant 0 : i32
    %c0_i32_0 = arith.constant 0 : i32
    %c0_i32_1 = arith.constant 0 : i32
    return %c0_i32, %c0_i32_0 : i32, i32
  }
}

</mosaic_0001>

<llo_original>
// kernel: charbonnier_ffl_loss.1
$region0: #{charbonnier_ffl_loss.1}
  #allocation0 [shape = 'u32[]', space=smem, size = 0x4, offset = 0x4, fixed_abs, tag = 'smem constant byte address 0x4 - core index']
  #allocation1 [shape = 'u32[144,128]{1,0:T(1,128)}', space=vmem, size = 0x12000, scoped, tag = 'internal scratch']
  %s0 = inlined_call_operand.vmem [shape: f32[16,128], index: 0, kind: input, shape index: {}]
  %s1 = inlined_call_operand.vmem [shape: f32[16,128], index: 1, kind: input, shape index: {}]
  %s2 = inlined_call_operand.vmem [shape: f32[32,16], index: 2, kind: input, shape index: {}]
  %s3 = inlined_call_operand.vmem [shape: f32[128,128], index: 3, kind: input, shape index: {}]
  %s4 = inlined_call_operand.vmem [shape: f32[128,128], index: 4, kind: input, shape index: {}]
  %s5 = inlined_call_operand.hbm [shape: f32[1,1], index: 5, kind: output, shape index: {}]
  %s6 = sld [smem:[#allocation0]]
  $region30: #{charbonnier_ffl_loss.1} parent=0
    _
  %s8 = ssub.s32 1, %s6
  %s9 = scalar_select 0, %s8, %s6
  $region1: #{charbonnier_ffl_loss.1} parent=0
    #allocation2 [shape = 'u8[512]{0}', space=vmem, size = 0x400, scoped, tag = 'output window, operand 0, single buffered']
    #allocation3 [shape = 's32[1]{0}', space=sflag, size = 0x4, scoped, tag = 'scoped memory for charbonnier_ffl_loss.1']
    %10 = vsyncpa [#allocation3], 0
    // Predicated region
    $region2: #{charbonnier_ffl_loss.1} parent=1 // pred_check
      _
    $region3: #{charbonnier_ffl_loss.1} parent=1 // pred_check_branch
      %12 = sbr.rel (0) target = $region5
    $region4: #{charbonnier_ffl_loss.1} parent=1 // pred_region
      _
    $region5: #{charbonnier_ffl_loss.1} parent=1 // pred_fallthru
      _
    // Predicated region
    $region6: #{charbonnier_ffl_loss.1} parent=1 // pred_check
      _
    $region7: #{charbonnier_ffl_loss.1} parent=1 // pred_check_branch
      %14 = sbr.rel (0) target = $region9
    $region8: #{charbonnier_ffl_loss.1} parent=1 // pred_region
      _
    $region9: #{charbonnier_ffl_loss.1} parent=1 // pred_fallthru
      _
    // Predicated region
    $region10: #{charbonnier_ffl_loss.1} parent=1 // pred_check
      _
    $region11: #{charbonnier_ffl_loss.1} parent=1 // pred_check_branch
      %16 = sbr.rel (0) target = $region13
    $region12: #{charbonnier_ffl_loss.1} parent=1 // pred_region
      _
    $region13: #{charbonnier_ffl_loss.1} parent=1 // pred_fallthru
      _
    // Predicated region
    $region14: #{charbonnier_ffl_loss.1} parent=1 // pred_check
      _
    $region15: #{charbonnier_ffl_loss.1} parent=1 // pred_check_branch
      %18 = sbr.rel (0) target = $region17
    $region16: #{charbonnier_ffl_loss.1} parent=1 // pred_region
      _
    $region17: #{charbonnier_ffl_loss.1} parent=1 // pred_fallthru
      _
    // Predicated region
    $region18: #{charbonnier_ffl_loss.1} parent=1 // pred_check
      _
    $region19: #{charbonnier_ffl_loss.1} parent=1 // pred_check_branch
      %20 = sbr.rel (0) target = $region21
    $region20: #{charbonnier_ffl_loss.1} parent=1 // pred_region
      _
    $region21: #{charbonnier_ffl_loss.1} parent=1 // pred_fallthru
      _
    %v21 = vld [vmem:[%s0] sm:$0xff]
    %v22 = vld [vmem:[%s0 + $0x8] sm:$0xff]
    %v23 = vld [vmem:[%s1] sm:$0xff]
    %v24 = vld [vmem:[%s1 + $0x8] sm:$0xff]
    %v25 = vsub.f32 %v21, %v23
    %v26 = vsub.f32 %v22, %v24
    %v27 = vmul.f32 %v25, %v25
    %v28 = vmul.f32 %v26, %v26
    %v29 = vadd.f32 %v27, 1e-06
    %v30 = vadd.f32 %v28, 1e-06
    %v31 = vrsqrt.pop %v29
    %v32 = vmul.f32 %v29, %v31
    %vm33 = vcmp.eq.f32.partialorder %v29, inf
    %v34 = vsel %vm33, %v29, %v32
    %vm35 = vcmp.eq.f32.partialorder %v29, 0.0
    %v36 = vand.u32 %v29, 2147483648
    %v37 = vsel %vm35, %v36, %v34
    %v38 = vrsqrt.pop %v30
    %v39 = vmul.f32 %v30, %v38
    %vm40 = vcmp.eq.f32.partialorder %v30, inf
    %v41 = vsel %vm40, %v30, %v39
    %vm42 = vcmp.eq.f32.partialorder %v30, 0.0
    %v43 = vand.u32 %v30, 2147483648
    %v44 = vsel %vm42, %v43, %v41
    %v45 = vadd.f32 %v37, %v44
    %46 = vadd.xlane.f32.xlu0 %v45
    %v47 = vpop.xlane.xlu0 %46
    %v48 = vrot.slane %v47, 4
    %v49 = vadd.f32 %v47, %v48
    %v50 = vrot.slane %v49, 2
    %v51 = vadd.f32 %v49, %v50
    %v52 = vrot.slane %v51, 1
    %v53 = vadd.f32 %v51, %v52
    %s54 = vtos %v53
    %v55 = vld [vmem:[%s2] sm:$0xff]
    %v56 = vld [vmem:[%s2 + $0x8] sm:$0xff]
    %v57 = vld [vmem:[%s2 + $0x10] sm:$0xff]
    %v58 = vld [vmem:[%s2 + $0x18] sm:$0xff]
    %vm59 = vcmask 130048
    %v61 = vsel %vm59, %v55, 0
    %v64 = vsel %vm59, %v56, 0
    %v67 = vsel %vm59, %v57, 0
    %v70 = vsel %vm59, %v58, 0
    %72 = vmatprep.subr.mxu0 0.0
    %73 = vmatpush1.msra.mxu0 %v25
    %74 = vmatprep.subr.mxu0 0.0
    %75 = vmatpush1.msra.mxu0 %v26
    %76 = vmatprep.subr.mxu0 0.0
    %77 = vmatpush1.msra.mxu0 0.0
    %78 = vmatprep.subr.mxu0 0.0
    %79 = vmatpush1.msra.mxu0 0.0
    %80 = vmatprep.subr.mxu0 0.0
    %81 = vmatpush1.msra.mxu0 0.0
    %82 = vmatprep.subr.mxu0 0.0
    %83 = vmatpush1.msra.mxu0 0.0
    %84 = vmatprep.subr.mxu0 0.0
    %85 = vmatpush1.msra.mxu0 0.0
    %86 = vmatprep.subr.mxu0 0.0
    %87 = vmatpush1.msra.mxu0 0.0
    %88 = vmatprep.subr.mxu0 0.0
    %89 = vmatpush1.msra.mxu0 0.0
    %90 = vmatprep.subr.mxu0 0.0
    %91 = vmatpush1.msra.mxu0 0.0
    %92 = vmatprep.subr.mxu0 0.0
    %93 = vmatpush1.msra.mxu0 0.0
    %94 = vmatprep.subr.mxu0 0.0
    %95 = vmatpush1.msra.mxu0 0.0
    %96 = vmatprep.subr.mxu0 0.0
    %97 = vmatpush1.msra.mxu0 0.0
    %98 = vmatprep.subr.mxu0 0.0
    %99 = vmatpush1.msra.mxu0 0.0
    %100 = vmatprep.subr.mxu0 0.0
    %101 = vmatpush1.msra.mxu0 0.0
    %102 = vmatprep.subr.mxu0 0.0
    %103 = vmatpush1.msra.mxu0 0.0
    %104 = vmatprep.subr.mxu0 0.0
    %105 = vmatpush1.msra.mxu0 0.0
    %106 = vmatprep.subr.mxu0 0.0
    %107 = vmatpush1.msra.mxu0 0.0
    %108 = vmatprep.subr.mxu0 0.0
    %109 = vmatpush1.msra.mxu0 0.0
    %110 = vmatprep.subr.mxu0 0.0
    %111 = vmatpush1.msra.mxu0 0.0
    %112 = vmatprep.subr.mxu0 0.0
    %113 = vmatpush1.msra.mxu0 0.0
    %114 = vmatprep.subr.mxu0 0.0
    %115 = vmatpush1.msra.mxu0 0.0
    %116 = vmatprep.subr.mxu0 0.0
    %117 = vmatpush1.msra.mxu0 0.0
    %118 = vmatprep.subr.mxu0 0.0
    %119 = vmatpush1.msra.mxu0 0.0
    %120 = vmatprep.subr.mxu0 0.0
    %121 = vmatpush1.msra.mxu0 0.0
    %122 = vmatprep.subr.mxu0 0.0
    %123 = vmatpush1.msra.mxu0 0.0
    %124 = vmatprep.subr.mxu0 0.0
    %125 = vmatpush1.msra.mxu0 0.0
    %126 = vmatprep.subr.mxu0 0.0
    %127 = vmatpush1.msra.mxu0 0.0
    %128 = vmatprep.subr.mxu0 0.0
    %129 = vmatpush1.msra.mxu0 0.0
    %130 = vmatprep.subr.mxu0 0.0
    %131 = vmatpush1.msra.mxu0 0.0
    %132 = vmatprep.subr.mxu0 0.0
    %133 = vmatpush1.msra.mxu0 0.0
    %134 = vmatprep.subr.mxu0 0.0
    %135 = vmatpush1.msra.mxu0 0.0
    %136 = vmatprep.mubr.f32.mxu0 0.0
    %137 = vmatmul.mubr.f32.gmra.mrb[0].mxu0 %v61
    %v138 = vpop.f32.mrb[0].mxu0
    %v139 = vadd.f32 0.0, %v138
    %v140 = vpop.f32.mrb[0].mxu0
    %141 = vmatprep.mubr.f32.mxu0 0.0
    %142 = vmatmul.mubr.f32.gmra.mrb[0].mxu0 %v64
    %v143 = vpop.f32.mrb[0].mxu0
    %v144 = vadd.f32 0.0, %v143
    %v145 = vpop.f32.mrb[0].mxu0
    %146 = vmatprep.mubr.f32.mxu0 0.0
    %147 = vmatmul.mubr.f32.gmra.mrb[0].mxu0 %v67
    %v148 = vpop.f32.mrb[0].mxu0
    %v149 = vadd.f32 0.0, %v148
    %v150 = vpop.f32.mrb[0].mxu0
    %151 = vmatprep.mubr.f32.mxu0 0.0
    %152 = vmatmul.mubr.f32.gmra.mrb[0].mxu0 %v70
    %v153 = vpop.f32.mrb[0].mxu0
    %v154 = vadd.f32 0.0, %v153
    %v155 = vpop.f32.mrb[0].mxu0
    %156 = vdwg.mxu0
    %v157 = vld [vmem:[%s3] sm:$0xff]
    %v158 = vld [vmem:[%s3 + $0x8] sm:$0xff]
    %v159 = vld [vmem:[%s3 + $0x10] sm:$0xff]
    %v160 = vld [vmem:[%s3 + $0x18] sm:$0xff]
    %v161 = vld [vmem:[%s3 + $0x20] sm:$0xff]
    %v162 = vld [vmem:[%s3 + $0x28] sm:$0xff]
    %v163 = vld [vmem:[%s3 + $0x30] sm:$0xff]
    %v164 = vld [vmem:[%s3 + $0x38] sm:$0xff]
    %v165 = vld [vmem:[%s3 + $0x40] sm:$0xff]
    %v166 = vld [vmem:[%s3 + $0x48] sm:$0xff]
    %v167 = vld [vmem:[%s3 + $0x50] sm:$0xff]
    %v168 = vld [vmem:[%s3 + $0x58] sm:$0xff]
    %v169 = vld [vmem:[%s3 + $0x60] sm:$0xff]
    %v170 = vld [vmem:[%s3 + $0x68] sm:$0xff]
    %v171 = vld [vmem:[%s3 + $0x70] sm:$0xff]
    %v172 = vld [vmem:[%s3 + $0x78] sm:$0xff]
    %173 = vmatprep.subr.mxu0 0.0
    %174 = vmatpush1.msra.mxu0 %v157
    %175 = vmatprep.subr.mxu0 0.0
    %176 = vmatpush1.msra.mxu0 %v158
    %177 = vmatprep.subr.mxu0 0.0
    %178 = vmatpush1.msra.mxu0 %v159
    %179 = vmatprep.subr.mxu0 0.0
    %180 = vmatpush1.msra.mxu0 %v160
    %181 = vmatprep.subr.mxu0 0.0
    %182 = vmatpush1.msra.mxu0 %v161
    %183 = vmatprep.subr.mxu0 0.0
    %184 = vmatpush1.msra.mxu0 %v162
    %185 = vmatprep.subr.mxu0 0.0
    %186 = vmatpush1.msra.mxu0 %v163
    %187 = vmatprep.subr.mxu0 0.0
    %188 = vmatpush1.msra.mxu0 %v164
    %189 = vmatprep.subr.mxu0 0.0
    %190 = vmatpush1.msra.mxu0 %v165
    %191 = vmatprep.subr.mxu0 0.0
    %192 = vmatpush1.msra.mxu0 %v166
    %193 = vmatprep.subr.mxu0 0.0
    %194 = vmatpush1.msra.mxu0 %v167
    %195 = vmatprep.subr.mxu0 0.0
    %196 = vmatpush1.msra.mxu0 %v168
    %197 = vmatprep.subr.mxu0 0.0
    %198 = vmatpush1.msra.mxu0 %v169
    %199 = vmatprep.subr.mxu0 0.0
    %200 = vmatpush1.msra.mxu0 %v170
    %201 = vmatprep.subr.mxu0 0.0
    %202 = vmatpush1.msra.mxu0 %v171
    %203 = vmatprep.subr.mxu0 0.0
    %204 = vmatpush1.msra.mxu0 %v172
    %205 = vmatprep.subr.mxu0 0.0
    %206 = vmatpush1.msra.mxu0 0.0
    %207 = vmatprep.subr.mxu0 0.0
    %208 = vmatpush1.msra.mxu0 0.0
    %209 = vmatprep.subr.mxu0 0.0
    %210 = vmatpush1.msra.mxu0 0.0
    %211 = vmatprep.subr.mxu0 0.0
    %212 = vmatpush1.msra.mxu0 0.0
    %213 = vmatprep.subr.mxu0 0.0
    %214 = vmatpush1.msra.mxu0 0.0
    %215 = vmatprep.subr.mxu0 0.0
    %216 = vmatpush1.msra.mxu0 0.0
    %217 = vmatprep.subr.mxu0 0.0
    %218 = vmatpush1.msra.mxu0 0.0
    %219 = vmatprep.subr.mxu0 0.0
    %220 = vmatpush1.msra.mxu0 0.0
    %221 = vmatprep.subr.mxu0 0.0
    %222 = vmatpush1.msra.mxu0 0.0
    %223 = vmatprep.subr.mxu0 0.0
    %224 = vmatpush1.msra.mxu0 0.0
    %225 = vmatprep.subr.mxu0 0.0
    %226 = vmatpush1.msra.mxu0 0.0
    %227 = vmatprep.subr.mxu0 0.0
    %228 = vmatpush1.msra.mxu0 0.0
    %229 = vmatprep.subr.mxu0 0.0
    %230 = vmatpush1.msra.mxu0 0.0
    %231 = vmatprep.subr.mxu0 0.0
    %232 = vmatpush1.msra.mxu0 0.0
    %233 = vmatprep.subr.mxu0 0.0
    %234 = vmatpush1.msra.mxu0 0.0
    %235 = vmatprep.subr.mxu0 0.0
    %236 = vmatpush1.msra.mxu0 0.0
    %237 = vmatprep.mubr.f32.mxu0 0.0
    %238 = vmatmul.mubr.f32.gmra.mrb[0].mxu0 %v139
    %v239 = vpop.f32.mrb[0].mxu0
    %v240 = vadd.f32 0.0, %v239
    %v241 = vpop.f32.mrb[0].mxu0
    %242 = vmatprep.mubr.f32.mxu0 0.0
    %243 = vmatmul.mubr.f32.gmra.mrb[0].mxu0 %v144
    %v244 = vpop.f32.mrb[0].mxu0
    %v245 = vadd.f32 0.0, %v244
    %v246 = vpop.f32.mrb[0].mxu0
    %247 = vmatprep.mubr.f32.mxu0 0.0
    %248 = vmatmul.mubr.f32.gmra.mrb[0].mxu0 %v149
    %v249 = vpop.f32.mrb[0].mxu0
    %v250 = vadd.f32 0.0, %v249
    %v251 = vpop.f32.mrb[0].mxu0
    %252 = vmatprep.mubr.f32.mxu0 0.0
    %253 = vmatmul.mubr.f32.gmra.mrb[0].mxu0 %v154
    %v254 = vpop.f32.mrb[0].mxu0
    %v255 = vadd.f32 0.0, %v254
    %v256 = vpop.f32.mrb[0].mxu0
    %257 = vdwg.mxu0
    %v258 = vld [vmem:[%s4] sm:$0xff]
    %v259 = vld [vmem:[%s4 + $0x8] sm:$0xff]
    %v260 = vld [vmem:[%s4 + $0x10] sm:$0xff]
    %v261 = vld [vmem:[%s4 + $0x18] sm:$0xff]
    %v262 = vld [vmem:[%s4 + $0x20] sm:$0xff]
    %v263 = vld [vmem:[%s4 + $0x28] sm:$0xff]
    %v264 = vld [vmem:[%s4 + $0x30] sm:$0xff]
    %v265 = vld [vmem:[%s4 + $0x38] sm:$0xff]
    %v266 = vld [vmem:[%s4 + $0x40] sm:$0xff]
    %v267 = vld [vmem:[%s4 + $0x48] sm:$0xff]
    %v268 = vld [vmem:[%s4 + $0x50] sm:$0xff]
    %v269 = vld [vmem:[%s4 + $0x58] sm:$0xff]
    %v270 = vld [vmem:[%s4 + $0x60] sm:$0xff]
    %v271 = vld [vmem:[%s4 + $0x68] sm:$0xff]
    %v272 = vld [vmem:[%s4 + $0x70] sm:$0xff]
    %v273 = vld [vmem:[%s4 + $0x78] sm:$0xff]
    %274 = vmatprep.subr.mxu0 0.0
    %275 = vmatpush1.msra.mxu0 %v258
    %276 = vmatprep.subr.mxu0 0.0
    %277 = vmatpush1.msra.mxu0 %v259
    %278 = vmatprep.subr.mxu0 0.0
    %279 = vmatpush1.msra.mxu0 %v260
    %280 = vmatprep.subr.mxu0 0.0
    %281 = vmatpush1.msra.mxu0 %v261
    %282 = vmatprep.subr.mxu0 0.0
    %283 = vmatpush1.msra.mxu0 %v262
    %284 = vmatprep.subr.mxu0 0.0
    %285 = vmatpush1.msra.mxu0 %v263
    %286 = vmatprep.subr.mxu0 0.0
    %287 = vmatpush1.msra.mxu0 %v264
    %288 = vmatprep.subr.mxu0 0.0
    %289 = vmatpush1.msra.mxu0 %v265
    %290 = vmatprep.subr.mxu0 0.0
    %291 = vmatpush1.msra.mxu0 %v266
    %292 = vmatprep.subr.mxu0 0.0
    %293 = vmatpush1.msra.mxu0 %v267
    %294 = vmatprep.subr.mxu0 0.0
    %295 = vmatpush1.msra.mxu0 %v268
    %296 = vmatprep.subr.mxu0 0.0
    %297 = vmatpush1.msra.mxu0 %v269
    %298 = vmatprep.subr.mxu0 0.0
    %299 = vmatpush1.msra.mxu0 %v270
    %300 = vmatprep.subr.mxu0 0.0
    %301 = vmatpush1.msra.mxu0 %v271
    %302 = vmatprep.subr.mxu0 0.0
    %303 = vmatpush1.msra.mxu0 %v272
    %304 = vmatprep.subr.mxu0 0.0
    %305 = vmatpush1.msra.mxu0 %v273
    %306 = vmatprep.subr.mxu0 0.0
    %307 = vmatpush1.msra.mxu0 0.0
    %308 = vmatprep.subr.mxu0 0.0
    %309 = vmatpush1.msra.mxu0 0.0
    %310 = vmatprep.subr.mxu0 0.0
    %311 = vmatpush1.msra.mxu0 0.0
    %312 = vmatprep.subr.mxu0 0.0
    %313 = vmatpush1.msra.mxu0 0.0
    %314 = vmatprep.subr.mxu0 0.0
    %315 = vmatpush1.msra.mxu0 0.0
    %316 = vmatprep.subr.mxu0 0.0
    %317 = vmatpush1.msra.mxu0 0.0
    %318 = vmatprep.subr.mxu0 0.0
    %319 = vmatpush1.msra.mxu0 0.0
    %320 = vmatprep.subr.mxu0 0.0
    %321 = vmatpush1.msra.mxu0 0.0
    %322 = vmatprep.subr.mxu0 0.0
    %323 = vmatpush1.msra.mxu0 0.0
    %324 = vmatprep.subr.mxu0 0.0
    %325 = vmatpush1.msra.mxu0 0.0
    %326 = vmatprep.subr.mxu0 0.0
    %327 = vmatpush1.msra.mxu0 0.0
    %328 = vmatprep.subr.mxu0 0.0
    %329 = vmatpush1.msra.mxu0 0.0
    %330 = vmatprep.subr.mxu0 0.0
    %331 = vmatpush1.msra.mxu0 0.0
    %332 = vmatprep.subr.mxu0 0.0
    %333 = vmatpush1.msra.mxu0 0.0
    %334 = vmatprep.subr.mxu0 0.0
    %335 = vmatpush1.msra.mxu0 0.0
    %336 = vmatprep.subr.mxu0 0.0
    %337 = vmatpush1.msra.mxu0 0.0
    %338 = vmatprep.mubr.f32.mxu0 0.0
    %339 = vmatmul.mubr.f32.gmra.mrb[0].mxu0 %v139
    %v340 = vpop.f32.mrb[0].mxu0
    %v341 = vadd.f32 0.0, %v340
    %v342 = vpop.f32.mrb[0].mxu0
    %343 = vmatprep.mubr.f32.mxu0 0.0
    %344 = vmatmul.mubr.f32.gmra.mrb[0].mxu0 %v144
    %v345 = vpop.f32.mrb[0].mxu0
    %v346 = vadd.f32 0.0, %v345
    %v347 = vpop.f32.mrb[0].mxu0
    %348 = vmatprep.mubr.f32.mxu0 0.0
    %349 = vmatmul.mubr.f32.gmra.mrb[0].mxu0 %v149
    %v350 = vpop.f32.mrb[0].mxu0
    %v351 = vadd.f32 0.0, %v350
    %v352 = vpop.f32.mrb[0].mxu0
    %353 = vmatprep.mubr.f32.mxu0 0.0
    %354 = vmatmul.mubr.f32.gmra.mrb[0].mxu0 %v154
    %v355 = vpop.f32.mrb[0].mxu0
    %v356 = vadd.f32 0.0, %v355
    %v357 = vpop.f32.mrb[0].mxu0
    %358 = vdwg.mxu0
    %v359 = vsub.f32 %v240, %v351
    %v360 = vsub.f32 %v245, %v356
    %v361 = vadd.f32 %v341, %v250
    %v362 = vadd.f32 %v346, %v255
    %v363 = vmul.f32 %v359, %v359
    %v364 = vmul.f32 %v360, %v360
    %v365 = vmul.f32 %v361, %v361
    %v366 = vmul.f32 %v362, %v362
    %v367 = vadd.f32 %v363, %v365
    %v368 = vadd.f32 %v364, %v366
    %v369 = vrsqrt.pop %v367
    %v370 = vmul.f32 %v367, %v369
    %vm371 = vcmp.eq.f32.partialorder %v367, inf
    %v372 = vsel %vm371, %v367, %v370
    %vm373 = vcmp.eq.f32.partialorder %v367, 0.0
    %v374 = vand.u32 %v367, 2147483648
    %v375 = vsel %vm373, %v374, %v372
    %v376 = vrsqrt.pop %v368
    %v377 = vmul.f32 %v368, %v376
    %vm378 = vcmp.eq.f32.partialorder %v368, inf
    %v379 = vsel %vm378, %v368, %v377
    %vm380 = vcmp.eq.f32.partialorder %v368, 0.0
    %v381 = vand.u32 %v368, 2147483648
    %v382 = vsel %vm380, %v381, %v379
    %v383 = vmul.f32 %v375, %v367
    %v384 = vmul.f32 %v382, %v368
    %v385 = vmax.f32 %v375, %v382
    %v386 = vrot.slane %v385, 4
    %v387 = vmax.f32 %v385, %v386
    %v388 = vrot.slane %v387, 2
    %v389 = vmax.f32 %v387, %v388
    %v390 = vrot.slane %v389, 1
    %v391 = vmax.f32 %v389, %v390
    %v392 = vadd.f32 %v383, %v384
    %v393 = vrot.slane %v392, 4
    %v394 = vadd.f32 %v392, %v393
    %v395 = vrot.slane %v394, 2
    %v396 = vadd.f32 %v394, %v395
    %v397 = vrot.slane %v396, 1
    %v398 = vadd.f32 %v396, %v397
    %v399 = vsel %vm59, %v391, -inf
    %400 = vmax.xlane.f32.xlu0 %v399
    %v401 = vpop.xlane.xlu0 %400
    %s402 = vtos %v401
    %vm403 = vcmask 122880
    %v404 = vsel %vm403, %v398, 0.0
    %405 = vadd.xlane.f32.xlu0 %v404
    %v406 = vpop.xlane.xlu0 %405
    %v407 = vrot.slane %v406, 4
    %v408 = vadd.f32 %v406, %v407
    %v409 = vrot.slane %v408, 2
    %v410 = vadd.f32 %v408, %v409
    %v411 = vrot.slane %v410, 1
    %v412 = vadd.f32 %v410, %v411
    %s413 = vtos %v412
    %p414 = scmp.gt.f32.partialorder %s402, 0.0
    %s415 = scalar_select %p414, %s402, 1.0
    %v416 = vstv %s415
    %v417 = vrcp.pop %v416
    %s418 = vtos %v417
    %s419 = smul.f32 %s413, %s418
    %s420 = scalar_select %p414, %s419, 0.0
    %s421 = sadd.f32 %s420, 0.0
    %vm422 = vcmask 261248
    %v423 = vsel %vm422, %v391, -inf
    %424 = vmax.xlane.f32.xlu0 %v423
    %v425 = vpop.xlane.xlu0 %424
    %s426 = vtos %v425
    %428 = vrot.lane.b32.xlu0 %v398, 112
    %v429 = vpop.permute.xlu0 %428
    %v431 = vsel %vm403, %v429, 0.0
    %432 = vadd.xlane.f32.xlu0 %v431
    %v433 = vpop.xlane.xlu0 %432
    %v434 = vrot.slane %v433, 4
    %v435 = vadd.f32 %v433, %v434
    %v436 = vrot.slane %v435, 2
    %v437 = vadd.f32 %v435, %v436
    %v438 = vrot.slane %v437, 1
    %v439 = vadd.f32 %v437, %v438
    %s440 = vtos %v439
    %p441 = scmp.gt.f32.partialorder %s426, 0.0
    %s442 = scalar_select %p441, %s426, 1.0
    %v443 = vstv %s442
    %v444 = vrcp.pop %v443
    %s445 = vtos %v444
    %s446 = smul.f32 %s440, %s445
    %s447 = scalar_select %p441, %s446, 0.0
    %s448 = sadd.f32 %s421, %s447
    %vm449 = vcmask 392448
    %v450 = vsel %vm449, %v391, -inf
    %451 = vmax.xlane.f32.xlu0 %v450
    %v452 = vpop.xlane.xlu0 %451
    %s453 = vtos %v452
    %454 = vrot.lane.b32.xlu0 %v398, 96
    %v455 = vpop.permute.xlu0 %454
    %v457 = vsel %vm403, %v455, 0.0
    %458 = vadd.xlane.f32.xlu0 %v457
    %v459 = vpop.xlane.xlu0 %458
    %v460 = vrot.slane %v459, 4
    %v461 = vadd.f32 %v459, %v460
    %v462 = vrot.slane %v461, 2
    %v463 = vadd.f32 %v461, %v462
    %v464 = vrot.slane %v463, 1
    %v465 = vadd.f32 %v463, %v464
    %s466 = vtos %v465
    %p467 = scmp.gt.f32.partialorder %s453, 0.0
    %s468 = scalar_select %p467, %s453, 1.0
    %v469 = vstv %s468
    %v470 = vrcp.pop %v469
    %s471 = vtos %v470
    %s472 = smul.f32 %s466, %s471
    %s473 = scalar_select %p467, %s472, 0.0
    %s474 = sadd.f32 %s448, %s473
    %vm475 = vcmask 523648
    %v476 = vsel %vm475, %v391, -inf
    %477 = vmax.xlane.f32.xlu0 %v476
    %v478 = vpop.xlane.xlu0 %477
    %s479 = vtos %v478
    %480 = vrot.lane.b32.xlu0 %v398, 80
    %v481 = vpop.permute.xlu0 %480
    %v483 = vsel %vm403, %v481, 0.0
    %484 = vadd.xlane.f32.xlu0 %v483
    %v485 = vpop.xlane.xlu0 %484
    %v486 = vrot.slane %v485, 4
    %v487 = vadd.f32 %v485, %v486
    %v488 = vrot.slane %v487, 2
    %v489 = vadd.f32 %v487, %v488
    %v490 = vrot.slane %v489, 1
    %v491 = vadd.f32 %v489, %v490
    %s492 = vtos %v491
    %p493 = scmp.gt.f32.partialorder %s479, 0.0
    %s494 = scalar_select %p493, %s479, 1.0
    %v495 = vstv %s494
    %v496 = vrcp.pop %v495
    %s497 = vtos %v496
    %s498 = smul.f32 %s492, %s497
    %s499 = scalar_select %p493, %s498, 0.0
    %s500 = sadd.f32 %s474, %s499
    %vm501 = vcmask 654848
    %v502 = vsel %vm501, %v391, -inf
    %503 = vmax.xlane.f32.xlu0 %v502
    %v504 = vpop.xlane.xlu0 %503
    %s505 = vtos %v504
    %506 = vrot.lane.b32.xlu0 %v398, 64
    %v507 = vpop.permute.xlu0 %506
    %v509 = vsel %vm403, %v507, 0.0
    %510 = vadd.xlane.f32.xlu0 %v509
    %v511 = vpop.xlane.xlu0 %510
    %v512 = vrot.slane %v511, 4
    %v513 = vadd.f32 %v511, %v512
    %v514 = vrot.slane %v513, 2
    %v515 = vadd.f32 %v513, %v514
    %v516 = vrot.slane %v515, 1
    %v517 = vadd.f32 %v515, %v516
    %s518 = vtos %v517
    %p519 = scmp.gt.f32.partialorder %s505, 0.0
    %s520 = scalar_select %p519, %s505, 1.0
    %v521 = vstv %s520
    %v522 = vrcp.pop %v521
    %s523 = vtos %v522
    %s524 = smul.f32 %s518, %s523
    %s525 = scalar_select %p519, %s524, 0.0
    %s526 = sadd.f32 %s500, %s525
    %vm527 = vcmask 786048
    %v528 = vsel %vm527, %v391, -inf
    %529 = vmax.xlane.f32.xlu0 %v528
    %v530 = vpop.xlane.xlu0 %529
    %s531 = vtos %v530
    %532 = vrot.lane.b32.xlu0 %v398, 48
    %v533 = vpop.permute.xlu0 %532
    %v535 = vsel %vm403, %v533, 0.0
    %536 = vadd.xlane.f32.xlu0 %v535
    %v537 = vpop.xlane.xlu0 %536
    %v538 = vrot.slane %v537, 4
    %v539 = vadd.f32 %v537, %v538
    %v540 = vrot.slane %v539, 2
    %v541 = vadd.f32 %v539, %v540
    %v542 = vrot.slane %v541, 1
    %v543 = vadd.f32 %v541, %v542
    %s544 = vtos %v543
    %p545 = scmp.gt.f32.partialorder %s531, 0.0
    %s546 = scalar_select %p545, %s531, 1.0
    %v547 = vstv %s546
    %v548 = vrcp.pop %v547
    %s549 = vtos %v548
    %s550 = smul.f32 %s544, %s549
    %s551 = scalar_select %p545, %s550, 0.0
    %s552 = sadd.f32 %s526, %s551
    %vm553 = vcmask 917248
    %v554 = vsel %vm553, %v391, -inf
    %555 = vmax.xlane.f32.xlu0 %v554
    %v556 = vpop.xlane.xlu0 %555
    %s557 = vtos %v556
    %558 = vrot.lane.b32.xlu0 %v398, 32
    %v559 = vpop.permute.xlu0 %558
    %v561 = vsel %vm403, %v559, 0.0
    %562 = vadd.xlane.f32.xlu0 %v561
    %v563 = vpop.xlane.xlu0 %562
    %v564 = vrot.slane %v563, 4
    %v565 = vadd.f32 %v563, %v564
    %v566 = vrot.slane %v565, 2
    %v567 = vadd.f32 %v565, %v566
    %v568 = vrot.slane %v567, 1
    %v569 = vadd.f32 %v567, %v568
    %s570 = vtos %v569
    %p571 = scmp.gt.f32.partialorder %s557, 0.0
    %s572 = scalar_select %p571, %s557, 1.0
    %v573 = vstv %s572
    %v574 = vrcp.pop %v573
    %s575 = vtos %v574
    %s576 = smul.f32 %s570, %s575
    %s577 = scalar_select %p571, %s576, 0.0
    %s578 = sadd.f32 %s552, %s577
    %vm579 = vcmask 1048448
    %v580 = vsel %vm579, %v391, -inf
    %581 = vmax.xlane.f32.xlu0 %v580
    %v582 = vpop.xlane.xlu0 %581
    %s583 = vtos %v582
    %584 = vrot.lane.b32.xlu0 %v398, 16
    %v585 = vpop.permute.xlu0 %584
    %v587 = vsel %vm403, %v585, 0.0
    %588 = vadd.xlane.f32.xlu0 %v587
    %v589 = vpop.xlane.xlu0 %588
    %v590 = vrot.slane %v589, 4
    %v591 = vadd.f32 %v589, %v590
    %v592 = vrot.slane %v591, 2
    %v593 = vadd.f32 %v591, %v592
    %v594 = vrot.slane %v593, 1
    %v595 = vadd.f32 %v593, %v594
    %s596 = vtos %v595
    %p597 = scmp.gt.f32.partialorder %s583, 0.0
    %s598 = scalar_select %p597, %s583, 1.0
    %v599 = vstv %s598
    %v600 = vrcp.pop %v599
    %s601 = vtos %v600
    %s602 = smul.f32 %s596, %s601
    %s603 = scalar_select %p597, %s602, 0.0
    %s604 = sadd.f32 %s578, %s603
    %s605 = sadd.f32 %s54, %s604
    %s606 = smul.f32 %s605, 0.00048828125
    %v607 = vstv %s606
    %vm608 = vcmask 0
    %609 = vst.msk [vmem:[#allocation2] sm:$0x1] %vm608, %v607
    // Predicated region
    $region22: #{charbonnier_ffl_loss.1} parent=1 // pred_check
      _
    $region23: #{charbonnier_ffl_loss.1} parent=1 // pred_check_branch
      %611 = sbr.rel (0) target = $region25
    $region24: #{charbonnier_ffl_loss.1} parent=1 // pred_region
      %s613 = ssub.s32 16, 16
      %614 = vsyncadd [#allocation3], %s613
      %s616 = sshll.u32 [#allocation2], 4
      %s617 = int_to_ptr.vmem [resolvable:$true] %s616
      %619 = dma.vmem_to_hbm [thread:$0]  %s617, 16, %s5, [#allocation3]
    $region25: #{charbonnier_ffl_loss.1} parent=1 // pred_fallthru
      _
    // Predicated region
    $region26: #{charbonnier_ffl_loss.1} parent=1 // pred_check
      _
    $region27: #{charbonnier_ffl_loss.1} parent=1 // pred_check_branch
      %621 = sbr.rel (0) target = $region29
    $region28: #{charbonnier_ffl_loss.1} parent=1 // pred_region
      %622 = dma.done [#allocation3], 16
    $region29: #{charbonnier_ffl_loss.1} parent=1 // pred_fallthru
      _
    %623 = vsyncpa [#allocation3], 1

</llo_original>
